<compile_context>
chip_gen: v5e
topology: v5e:2x2
jax: 0.10.0
libtpu: 0.0.40
codegen_flags: <defaults>
</compile_context>

<pallas_src>
import functools
import math

import jax
import jax.numpy as jnp
from jax import lax
from jax.experimental import pallas as pl
from jax.experimental.pallas import tpu as pltpu

EPS = 1e-5                       # nn.LayerNorm default eps
_NEG_INF = -1e30

_BUFFERED_KV_OK = None           # probed once: does this jax accept pl.Buffered specs?


# ----------------------------------------------------------------------------
# small helpers
# ----------------------------------------------------------------------------
def _layernorm(x, g, b):
    mu = jnp.mean(x, axis=-1, keepdims=True)
    var = jnp.mean((x - mu) ** 2, axis=-1, keepdims=True)
    return (x - mu) * lax.rsqrt(var + EPS) * g + b


def _gelu_exact(x):
    # PyTorch nn.GELU() default: 0.5 * x * (1 + erf(x / sqrt(2)))
    return 0.5 * x * (1.0 + lax.erf(x * (1.0 / math.sqrt(2.0))))


def _seq_tile(t, target):
    """Largest sequence tile <= target that divides T (whole T if T <= target)."""
    if t <= target:
        return t
    cand = target
    while cand >= 8:
        if t % cand == 0:
            return cand
        cand -= 8
    # TODO(synk): T with no multiple-of-8 divisor <= target falls back to tile=T;
    # a pl.cdiv grid + in-kernel tail masking would keep the VMEM footprint bounded
    # for awkward (e.g. prime) sequence lengths.
    return t


def _tpu_generation():
    try:
        kind = jax.devices()[0].device_kind.lower()
    except Exception:
        kind = ""
    if "v7" in kind:
        return "v7"
    if "v6" in kind:
        return "v6"
    if "v5" in kind:
        return "v5"
    return "other"


def _gen_config():
    """Generation-aware tiling / VMEM / pipelining knobs."""
    gen = _tpu_generation()
    if gen == "v7":
        # 64 MiB physical VMEM: smaller tiles, modest scoped-VMEM cap, default
        # double buffering; bf16 EUP available.
        return dict(tile_target=256, vmem_limit=40 * 1024 * 1024,
                    kv_buffers=2, bf16_exp=True)
    if gen == "v6":
        return dict(tile_target=512, vmem_limit=100 * 1024 * 1024,
                    kv_buffers=3, bf16_exp=True)
    if gen == "v5":
        # 128 MiB VMEM but no bf16 EUP/VPU -> keep exp in f32
        return dict(tile_target=512, vmem_limit=100 * 1024 * 1024,
                    kv_buffers=3, bf16_exp=False)
    # unknown generation: conservative defaults
    return dict(tile_target=256, vmem_limit=32 * 1024 * 1024,
                kv_buffers=2, bf16_exp=False)


def prepare_layer_params(layer_params, n_heads):
    """One-time parameter prep (do this outside the forward pass):
       * split Wqkv into a Q projection (consumed in-kernel by K2) and a KV
         projection (K1)
       * fold the 1/sqrt(head_dim) attention scale into Wq / bq (free; removes a
         per-kv-step VPU multiply from the hot loop)
       * pre-cast all matmul weights to bf16 once (no per-forward astype traffic)."""
    prepped = []
    for p in layer_params:
        H = p["wproj"].shape[0]
        scale = 1.0 / math.sqrt(H // n_heads)
        prepped.append({
            "g1": p["g1"], "be1": p["be1"],
            "wq": (p["wqkv"][:, :H] * scale).astype(jnp.bfloat16),
            "bq": (p["bqkv"][:, :H] * scale).astype(jnp.float32),
            "wkv": p["wqkv"][:, H:].astype(jnp.bfloat16),
            "bkv": p["bqkv"][:, H:].astype(jnp.float32),
            "wproj": p["wproj"].astype(jnp.bfloat16), "bproj": p["bproj"],
            "g2": p["g2"], "be2": p["be2"],
            "wf1": p["wf1"].astype(jnp.bfloat16), "bf1": p["bf1"],
            "wf2": p["wf2"].astype(jnp.bfloat16), "bf2": p["bf2"],
        })
    return prepped


# ----------------------------------------------------------------------------
# Kernel 1: ln1(x) @ Wkv  ->  k, v  (head-major [nH, Tt, hd], bf16)
# ----------------------------------------------------------------------------
def ln_kv_kernel(x_ref, g1_ref, be1_ref, wkv_ref, bkv_ref, k_ref, v_ref, *, n_heads):
    H = x_ref.shape[-1]
    hd = H // n_heads
    xn = _layernorm(x_ref[...], g1_ref[0], be1_ref[0])          # f32 statistics
    kv = jnp.dot(xn.astype(jnp.bfloat16), wkv_ref[...],
                 preferred_element_type=jnp.float32) + bkv_ref[0]
    for h in range(n_heads):               # once per tile (not hot); head-major stores
        k_ref[h] = kv[:, h * hd:(h + 1) * hd].astype(k_ref.dtype)
        v_ref[h] = kv[:, H + h * hd:H + (h + 1) * hd].astype(v_ref.dtype)


def _ln_kv_call(x, p, n_heads, tile, cfg):
    B, T, H = x.shape
    hd = H // n_heads
    w_vmem = pl.BlockSpec(memory_space=pltpu.MemorySpace.VMEM)  # resident, single copy
    return pl.pallas_call(
        functools.partial(ln_kv_kernel, n_heads=n_heads),
        out_shape=(jax.ShapeDtypeStruct((B, n_heads, T, hd), jnp.bfloat16),
                   jax.ShapeDtypeStruct((B, n_heads, T, hd), jnp.bfloat16)),
        grid_spec=pltpu.PrefetchScalarGridSpec(
            num_scalar_prefetch=0,
            grid=(B, T // tile),
            in_specs=[pl.BlockSpec((None, tile, H), lambda b, t: (b, t, 0)),
                      w_vmem, w_vmem, w_vmem, w_vmem],
            out_specs=[pl.BlockSpec((None, n_heads, tile, hd),
                                    lambda b, t: (b, 0, t, 0))] * 2,
        ),
        compiler_params=pltpu.CompilerParams(
            dimension_semantics=("parallel", "parallel"),
            vmem_limit_bytes=cfg["vmem_limit"]),
    )(x, p["g1"], p["be1"], p["wkv"], p["bkv"])


# ----------------------------------------------------------------------------
# Kernel 2: flash attention (online softmax over kv tiles) + output projection
#           + residual + ln2 + MLP + residual, all per q-tile.
# ----------------------------------------------------------------------------
def flash_block_kernel(x_ref, k_ref, v_ref, mask_ref,
                       g1_ref, be1_ref, wq_ref, bq_ref,
                       wproj_ref, bproj_ref, g2_ref, be2_ref,
                       wf1_ref, bf1_ref, wf2_ref, bf2_ref,
                       o_ref,
                       q_scr, m_scr, l_scr, acc_scr,
                       *, n_heads, tile, use_bf16_exp):
    qi = pl.program_id(1)
    ki = pl.program_id(2)
    nkv = pl.num_programs(2)
    hd = acc_scr.shape[-1]

    @pl.when(ki == 0)
    def _init():
        # LN1 + (scale-folded) Q projection once per q tile, kept resident in VMEM
        # for all kv steps -> q never round-trips through HBM.
        xn = _layernorm(x_ref[...], g1_ref[0], be1_ref[0])
        q = jnp.dot(xn.astype(jnp.bfloat16), wq_ref[...],
                    preferred_element_type=jnp.float32) + bq_ref[0]
        for h in range(n_heads):                      # once per q tile (not hot)
            q_scr[h] = q[:, h * hd:(h + 1) * hd].astype(q_scr.dtype)
        m_scr[...] = jnp.full(m_scr.shape, -jnp.inf, m_scr.dtype)
        l_scr[...] = jnp.zeros(l_scr.shape, l_scr.dtype)
        acc_scr[...] = jnp.zeros(acc_scr.shape, acc_scr.dtype)

    # Causal skip: kv tiles strictly above the diagonal do no compute, and their
    # DMAs are elided by the min(ki, qi) index maps (block index repeats).
    @pl.when(ki <= qi)
    def _compute():
        row = qi * tile + lax.broadcasted_iota(jnp.int32, (tile, tile), 0)
        col = ki * tile + lax.broadcasted_iota(jnp.int32, (tile, tile), 1)
        bias = jnp.where(col <= row, mask_ref[...], _NEG_INF)   # fused causal+key mask

        def head_body(h, carry):
            q_h = q_scr[h]                            # (tq, hd) bf16, scale pre-folded
            k_h = k_ref[h]                            # (tk, hd) bf16
            v_h = v_ref[h]                            # (tk, hd) bf16
            s = lax.dot_general(q_h, k_h, (((1,), (1,)), ((), ())),
                                preferred_element_type=jnp.float32) + bias
            m_prev = m_scr[h]                         # (tq, 1) f32
            m_new = jnp.maximum(m_prev, jnp.max(s, axis=-1, keepdims=True))
            alpha = jnp.exp(m_prev - m_new)           # f32 rescale
            if use_bf16_exp:                          # bf16 EUP (v6e / v7x)
                p = jnp.exp((s - m_new).astype(jnp.bfloat16))
            else:                                     # v5e: no bf16 EUP/VPU
                p = jnp.exp(s - m_new).astype(jnp.bfloat16)
            # denominator row-sum accumulated in f32 for numerical stability
            l_scr[h] = alpha * l_scr[h] + jnp.sum(p.astype(jnp.float32),
                                                  axis=-1, keepdims=True)
            acc_scr[h] = alpha * acc_scr[h] + jnp.dot(
                p, v_h, preferred_element_type=jnp.float32)
            m_scr[h] = m_new
            return carry

        # fori_loop (not a Python unroll) bounds per-head vreg live ranges.
        lax.fori_loop(0, n_heads, head_body, 0)

    @pl.when(ki == nkv - 1)
    def _finalize():
        # exact reciprocal: runs once per q tile, negligible cost
        ctx = jnp.concatenate(
            [acc_scr[h] / l_scr[h] for h in range(n_heads)], axis=-1)   # (tq, H) f32
        attn_out = jnp.dot(ctx.astype(jnp.bfloat16), wproj_ref[...],
                           preferred_element_type=jnp.float32) + bproj_ref[0]
        x1 = x_ref[...] + attn_out                    # residual 1 (dropout = identity)

        x2n = _layernorm(x1, g2_ref[0], be2_ref[0])
        hmid = jnp.dot(x2n.astype(jnp.bfloat16), wf1_ref[...],
                       preferred_element_type=jnp.float32) + bf1_ref[0]
        hmid = _gelu_exact(hmid)
        ff = jnp.dot(hmid.astype(jnp.bfloat16), wf2_ref[...],
                     preferred_element_type=jnp.float32) + bf2_ref[0]
        o_ref[...] = (x1 + ff).astype(o_ref.dtype)    # residual 2 (dropout = identity)


def _kv_block_spec(shape, index_map, buffers):
    if buffers > 2:
        try:
            return pl.BlockSpec(shape, index_map, pipeline_mode=pl.Buffered(buffers))
        except Exception:               # jax without pipeline_mode kwarg -> default
            pass
    return pl.BlockSpec(shape, index_map)


def _attn_mlp_call(x, k, v, mask3, p, n_heads, tile, cfg):
    global _BUFFERED_KV_OK
    B, T, H = x.shape
    hd = H // n_heads
    # TODO(synk): resident bf16 weights (Wq + Wproj + Wf1 + Wf2 ~ 12*H^2 bytes/layer)
    # stop fitting v7x's 64 MiB VMEM around H ~ 1536-2048; above that, stream the
    # MLP/QKV weights with real BlockSpecs over an output-N grid axis instead of
    # memory_space=VMEM residency.
    w_vmem = pl.BlockSpec(memory_space=pltpu.MemorySpace.VMEM)
    kernel = functools.partial(flash_block_kernel, n_heads=n_heads, tile=tile,
                               use_bf16_exp=cfg["bf16_exp"])

    def kv_idx(b, qi, ki):
        # Above the causal diagonal the block index repeats -> Pallas elides the DMA.
        return (b, 0, jnp.minimum(ki, qi), 0)

    def mask_idx(b, qi, ki):
        return (b, 0, jnp.minimum(ki, qi))

    def run(buffers):
        return pl.pallas_call(
            kernel,
            out_shape=jax.ShapeDtypeStruct((B, T, H), x.dtype),
            grid_spec=pltpu.PrefetchScalarGridSpec(
                num_scalar_prefetch=0,
                grid=(B, T // tile, T // tile),
                in_specs=[
                    pl.BlockSpec((None, tile, H), lambda b, qi, ki: (b, qi, 0)),   # x
                    _kv_block_spec((None, n_heads, tile, hd), kv_idx, buffers),    # k
                    _kv_block_spec((None, n_heads, tile, hd), kv_idx, buffers),    # v
                    _kv_block_spec((None, 1, tile), mask_idx, buffers),            # mask
                ] + [w_vmem] * 12,                                                 # weights
                out_specs=pl.BlockSpec((None, tile, H), lambda b, qi, ki: (b, qi, 0)),
                scratch_shapes=[
                    pltpu.VMEM((n_heads, tile, hd), jnp.bfloat16),  # q (recomputed)
                    pltpu.VMEM((n_heads, tile, 1), jnp.float32),    # running max m
                    pltpu.VMEM((n_heads, tile, 1), jnp.float32),    # running denom l
                    pltpu.VMEM((n_heads, tile, hd), jnp.float32),   # ctx accumulator
                ]),
            compiler_params=pltpu.CompilerParams(
                dimension_semantics=("parallel", "parallel", "arbitrary"),
                vmem_limit_bytes=cfg["vmem_limit"]),
        )(x, k, v, mask3,
          p["g1"], p["be1"], p["wq"], p["bq"],
          p["wproj"], p["bproj"], p["g2"], p["be2"],
          p["wf1"], p["bf1"], p["wf2"], p["bf2"])

    bufs = cfg["kv_buffers"]
    if bufs > 2:
        if _BUFFERED_KV_OK is None:
            try:
                out = jax.block_until_ready(run(bufs))
                _BUFFERED_KV_OK = True
                return out
            except Exception:
                _BUFFERED_KV_OK = False   # fall back to default double buffering
        elif _BUFFERED_KV_OK:
            return run(bufs)
    return run(2)


# ----------------------------------------------------------------------------
# Transformer wrapper (the nn.Module `Transformer.forward`)
# ----------------------------------------------------------------------------
def transformer(x, key_mask, prepped_params, n_heads):
    """x: [B, T, H] f32; key_mask: additive f32 key mask [B, T] (0 keep, large
    negative mask) or None; prepped_params from prepare_layer_params(...)."""
    B, T, H = x.shape
    cfg = _gen_config()
    tile = _seq_tile(T, cfg["tile_target"])
    if key_mask is None:
        key_mask = jnp.zeros((B, T), jnp.float32)
    # Clamp to a finite large-negative value: a true -inf would make the online
    # softmax rescale compute exp(-inf - -inf) = NaN on fully masked rows.
    mask3 = jnp.maximum(key_mask.astype(jnp.float32), _NEG_INF).reshape(B, 1, T)
    for p in prepped_params:
        k, v = _ln_kv_call(x, p, n_heads, tile, cfg)
        x = _attn_mlp_call(x, k, v, mask3, p, n_heads, tile, cfg)
    return x


# ----------------------------------------------------------------------------
# Pure-JAX f32 reference (for correctness check)
# ----------------------------------------------------------------------------
def _block_ref(x, key_mask, p, n_heads):
    B, T, H = x.shape
    hd = H // n_heads

    def ln(v, g, b):
        mu = jnp.mean(v, -1, keepdims=True)
        var = jnp.mean((v - mu) ** 2, -1, keepdims=True)
        return (v - mu) / jnp.sqrt(var + EPS) * g + b

    xn = ln(x, p["g1"][0], p["be1"][0])
    qkv = xn @ p["wqkv"] + p["bqkv"][0]
    q, k, v = jnp.split(qkv, 3, axis=-1)
    q = q.reshape(B, T, n_heads, hd)
    k = k.reshape(B, T, n_heads, hd)
    v = v.reshape(B, T, n_heads, hd)
    s = jnp.einsum("bqhd,bkhd->bhqk", q, k) / math.sqrt(hd)
    causal = jnp.tril(jnp.ones((T, T), bool))
    s = jnp.where(causal[None, None], s + key_mask[:, None, None, :], _NEG_INF)
    a = jax.nn.softmax(s, axis=-1)
    ctx = jnp.einsum("bhqk,bkhd->bqhd", a, v).reshape(B, T, H)
    x1 = x + ctx @ p["wproj"] + p["bproj"][0]
    x2n = ln(x1, p["g2"][0], p["be2"][0])
    h = x2n @ p["wf1"] + p["bf1"][0]
    h = 0.5 * h * (1.0 + lax.erf(h / math.sqrt(2.0)))
    return x1 + h @ p["wf2"] + p["bf2"][0]


def transformer_ref(x, key_mask, layer_params, n_heads):
    if key_mask is None:
        key_mask = jnp.zeros((x.shape[0], x.shape[1]), jnp.float32)
    for p in layer_params:
        x = _block_ref(x, key_mask, p, n_heads)
    return x


if __name__ == "__main__":
    B, T, H, NH, NL = 2, 8, 32, 4, 2

    key = jax.random.PRNGKey(0)

    def init_w(k, shape, scale=0.05):
        return (scale * jax.random.normal(k, shape)).astype(jnp.float32)

    layer_params = []
    for li in range(NL):
        ks = jax.random.split(jax.random.fold_in(key, li), 8)
        layer_params.append({
            "g1":    jnp.ones((1, H), jnp.float32),
            "be1":   jnp.zeros((1, H), jnp.float32),
            "wqkv":  init_w(ks[0], (H, 3 * H)),
            "bqkv":  init_w(ks[1], (1, 3 * H)),
            "wproj": init_w(ks[2], (H, H)),
            "bproj": init_w(ks[3], (1, H)),
            "g2":    jnp.ones((1, H), jnp.float32),
            "be2":   jnp.zeros((1, H), jnp.float32),
            "wf1":   init_w(ks[4], (H, 2 * H)),
            "bf1":   init_w(ks[5], (1, 2 * H)),
            "wf2":   init_w(ks[6], (2 * H, H)),
            "bf2":   init_w(ks[7], (1, H)),
        })

    x = jax.random.normal(jax.random.fold_in(key, 100), (B, T, H), jnp.float32)

    # additive key mask: batch 1 masks out the last 2 key positions
    key_mask = jnp.zeros((B, T), jnp.float32).at[1, -2:].set(_NEG_INF)

    prepped = prepare_layer_params(layer_params, NH)   # one-time weight prep (bf16 etc.)

    out = transformer(x, key_mask, prepped, NH)
    out = jax.block_until_ready(out)

    ref = transformer_ref(x, key_mask, layer_params, NH)
    assert out.shape == (B, T, H)
    max_err = float(jnp.max(jnp.abs(out - ref)))
    # bf16 matmul inputs / bf16 exp with f32 accumulation -> loosened tolerance
    assert jnp.allclose(out, ref, rtol=2e-2, atol=2e-2), \
        f"mismatch vs reference (max abs err = {max_err})"

    print("KERNEL_OK")
</pallas_src>

<mosaic_0001>
module attributes {stable_mosaic.version = 11 : i64} {
  func.func @ln_kv_kernel(%arg0: i32, %arg1: i32, %arg2: memref<1x8x32xf32, #tpu.memory_space<vmem>>, %arg3: memref<1x32xf32, #tpu.memory_space<vmem>>, %arg4: memref<1x32xf32, #tpu.memory_space<vmem>>, %arg5: memref<32x64xbf16, #tpu.memory_space<vmem>>, %arg6: memref<1x64xf32, #tpu.memory_space<vmem>>, %arg7: memref<1x4x8x8xbf16, #tpu.memory_space<vmem>>, %arg8: memref<1x4x8x8xbf16, #tpu.memory_space<vmem>>) attributes {dimension_semantics = [#tpu.dimension_semantics<parallel>, #tpu.dimension_semantics<parallel>], iteration_bounds = array<i64: 2, 1>, scalar_prefetch = 0 : i64, scratch_operands = 0 : i64, tpu.core_type = #tpu.core_type<tc>, window_params = [{transform_indices = @transform_0, window_bounds = array<i64: 1, 8, 32>}, {pipeline_mode = #tpu.pipeline_mode<synchronous>, transform_indices = @transform_1, window_bounds = array<i64: 1, 32>}, {pipeline_mode = #tpu.pipeline_mode<synchronous>, transform_indices = @transform_2, window_bounds = array<i64: 1, 32>}, {pipeline_mode = #tpu.pipeline_mode<synchronous>, transform_indices = @transform_3, window_bounds = array<i64: 32, 64>}, {pipeline_mode = #tpu.pipeline_mode<synchronous>, transform_indices = @transform_4, window_bounds = array<i64: 1, 64>}, {transform_indices = @transform_5, window_bounds = array<i64: 1, 4, 8, 8>}, {transform_indices = @transform_6, window_bounds = array<i64: 1, 4, 8, 8>}]} {
    %c0 = arith.constant 0 : index
    %c0_0 = arith.constant 0 : index
    %c0_1 = arith.constant 0 : index
    %0 = vector.load %arg2[%c0, %c0_0, %c0_1] : memref<1x8x32xf32, #tpu.memory_space<vmem>>, vector<1x8x32xf32>
    %1 = vector.shape_cast %0 : vector<1x8x32xf32> to vector<8x32xf32>
    %c0_2 = arith.constant 0 : index
    %c0_3 = arith.constant 0 : index
    %2 = vector.load %arg3[%c0_2, %c0_3] : memref<1x32xf32, #tpu.memory_space<vmem>>, vector<1x32xf32>
    %3 = vector.shape_cast %2 : vector<1x32xf32> to vector<32xf32>
    %c0_4 = arith.constant 0 : index
    %c0_5 = arith.constant 0 : index
    %4 = vector.load %arg4[%c0_4, %c0_5] : memref<1x32xf32, #tpu.memory_space<vmem>>, vector<1x32xf32>
    %5 = vector.shape_cast %4 : vector<1x32xf32> to vector<32xf32>
    %cst = arith.constant dense<0.000000e+00> : vector<8xf32>
    %6 = vector.multi_reduction <add>, %1, %cst [1] : vector<8x32xf32> to vector<8xf32>
    %7 = vector.shape_cast %6 : vector<8xf32> to vector<8x1xf32>
    %cst_6 = arith.constant 3.200000e+01 : f32
    %8 = vector.broadcast %cst_6 : f32 to vector<8x1xf32>
    %9 = arith.divf %7, %8 : vector<8x1xf32>
    %10 = vector.broadcast %9 : vector<8x1xf32> to vector<8x32xf32>
    %11 = arith.subf %1, %10 : vector<8x32xf32>
    %12 = arith.mulf %11, %11 : vector<8x32xf32>
    %cst_7 = arith.constant dense<0.000000e+00> : vector<8xf32>
    %13 = vector.multi_reduction <add>, %12, %cst_7 [1] : vector<8x32xf32> to vector<8xf32>
    %14 = vector.shape_cast %13 : vector<8xf32> to vector<8x1xf32>
    %cst_8 = arith.constant 3.200000e+01 : f32
    %15 = vector.broadcast %cst_8 : f32 to vector<8x1xf32>
    %16 = arith.divf %14, %15 : vector<8x1xf32>
    %17 = vector.broadcast %9 : vector<8x1xf32> to vector<8x32xf32>
    %18 = arith.subf %1, %17 : vector<8x32xf32>
    %cst_9 = arith.constant 9.99999974E-6 : f32
    %19 = vector.broadcast %cst_9 : f32 to vector<8x1xf32>
    %20 = arith.addf %16, %19 : vector<8x1xf32>
    %21 = math.rsqrt %20 : vector<8x1xf32>
    %22 = vector.broadcast %21 : vector<8x1xf32> to vector<8x32xf32>
    %23 = arith.mulf %18, %22 : vector<8x32xf32>
    %24 = vector.shape_cast %3 : vector<32xf32> to vector<1x32xf32>
    %25 = vector.broadcast %24 : vector<1x32xf32> to vector<8x32xf32>
    %26 = arith.mulf %23, %25 : vector<8x32xf32>
    %27 = vector.shape_cast %5 : vector<32xf32> to vector<1x32xf32>
    %28 = vector.broadcast %27 : vector<1x32xf32> to vector<8x32xf32>
    %29 = arith.addf %26, %28 : vector<8x32xf32>
    %30 = arith.truncf %29 : vector<8x32xf32> to vector<8x32xbf16>
    %c0_10 = arith.constant 0 : index
    %c0_11 = arith.constant 0 : index
    %31 = vector.load %arg5[%c0_10, %c0_11] : memref<32x64xbf16, #tpu.memory_space<vmem>>, vector<32x64xbf16>
    %cst_12 = arith.constant dense<0.000000e+00> : vector<8x64xf32>
    %32 = tpu.matmul %30, %31, %cst_12 {dimension_numbers = #tpu.dot_dimension_numbers<[1], [0], [0], [1], [0, 0, 1, 1], [], []>} : vector<8x32xbf16>, vector<32x64xbf16>, vector<8x64xf32> -> vector<8x64xf32>
    %c0_13 = arith.constant 0 : index
    %c0_14 = arith.constant 0 : index
    %33 = vector.load %arg6[%c0_13, %c0_14] : memref<1x64xf32, #tpu.memory_space<vmem>>, vector<1x64xf32>
    %34 = vector.shape_cast %33 : vector<1x64xf32> to vector<64xf32>
    %35 = vector.shape_cast %34 : vector<64xf32> to vector<1x64xf32>
    %36 = vector.broadcast %35 : vector<1x64xf32> to vector<8x64xf32>
    %37 = arith.addf %32, %36 : vector<8x64xf32>
    %38 = vector.extract_strided_slice %37 {offsets = [0, 0], sizes = [8, 8], strides = [1, 1]} : vector<8x64xf32> to vector<8x8xf32>
    %39 = arith.truncf %38 : vector<8x8xf32> to vector<8x8xbf16>
    %c0_15 = arith.constant 0 : index
    %c0_16 = arith.constant 0 : index
    %c0_17 = arith.constant 0 : index
    %c0_18 = arith.constant 0 : index
    %40 = vector.load %arg7[%c0_15, %c0_16, %c0_17, %c0_18] : memref<1x4x8x8xbf16, #tpu.memory_space<vmem>>, vector<1x1x8x8xbf16>
    %41 = vector.shape_cast %40 : vector<1x1x8x8xbf16> to vector<8x8xbf16>
    %42 = vector.shape_cast %39 : vector<8x8xbf16> to vector<1x1x8x8xbf16>
    tpu.vector_store %arg7[%c0_15, %c0_16, %c0_17, %c0_18], %42 {strides = array<i32>} : memref<1x4x8x8xbf16, #tpu.memory_space<vmem>>, vector<1x1x8x8xbf16>,
    %43 = vector.extract_strided_slice %37 {offsets = [0, 32], sizes = [8, 8], strides = [1, 1]} : vector<8x64xf32> to vector<8x8xf32>
    %44 = arith.truncf %43 : vector<8x8xf32> to vector<8x8xbf16>
    %c0_19 = arith.constant 0 : index
    %c0_20 = arith.constant 0 : index
    %c0_21 = arith.constant 0 : index
    %c0_22 = arith.constant 0 : index
    %45 = vector.load %arg8[%c0_19, %c0_20, %c0_21, %c0_22] : memref<1x4x8x8xbf16, #tpu.memory_space<vmem>>, vector<1x1x8x8xbf16>
    %46 = vector.shape_cast %45 : vector<1x1x8x8xbf16> to vector<8x8xbf16>
    %47 = vector.shape_cast %44 : vector<8x8xbf16> to vector<1x1x8x8xbf16>
    tpu.vector_store %arg8[%c0_19, %c0_20, %c0_21, %c0_22], %47 {strides = array<i32>} : memref<1x4x8x8xbf16, #tpu.memory_space<vmem>>, vector<1x1x8x8xbf16>,
    %48 = vector.extract_strided_slice %37 {offsets = [0, 8], sizes = [8, 8], strides = [1, 1]} : vector<8x64xf32> to vector<8x8xf32>
    %49 = arith.truncf %48 : vector<8x8xf32> to vector<8x8xbf16>
    %c0_23 = arith.constant 0 : index
    %c1 = arith.constant 1 : index
    %c0_24 = arith.constant 0 : index
    %c0_25 = arith.constant 0 : index
    %50 = vector.load %arg7[%c0_23, %c1, %c0_24, %c0_25] : memref<1x4x8x8xbf16, #tpu.memory_space<vmem>>, vector<1x1x8x8xbf16>
    %51 = vector.shape_cast %50 : vector<1x1x8x8xbf16> to vector<8x8xbf16>
    %52 = vector.shape_cast %49 : vector<8x8xbf16> to vector<1x1x8x8xbf16>
    tpu.vector_store %arg7[%c0_23, %c1, %c0_24, %c0_25], %52 {strides = array<i32>} : memref<1x4x8x8xbf16, #tpu.memory_space<vmem>>, vector<1x1x8x8xbf16>,
    %53 = vector.extract_strided_slice %37 {offsets = [0, 40], sizes = [8, 8], strides = [1, 1]} : vector<8x64xf32> to vector<8x8xf32>
    %54 = arith.truncf %53 : vector<8x8xf32> to vector<8x8xbf16>
    %c0_26 = arith.constant 0 : index
    %c1_27 = arith.constant 1 : index
    %c0_28 = arith.constant 0 : index
    %c0_29 = arith.constant 0 : index
    %55 = vector.load %arg8[%c0_26, %c1_27, %c0_28, %c0_29] : memref<1x4x8x8xbf16, #tpu.memory_space<vmem>>, vector<1x1x8x8xbf16>
    %56 = vector.shape_cast %55 : vector<1x1x8x8xbf16> to vector<8x8xbf16>
    %57 = vector.shape_cast %54 : vector<8x8xbf16> to vector<1x1x8x8xbf16>
    tpu.vector_store %arg8[%c0_26, %c1_27, %c0_28, %c0_29], %57 {strides = array<i32>} : memref<1x4x8x8xbf16, #tpu.memory_space<vmem>>, vector<1x1x8x8xbf16>,
    %58 = vector.extract_strided_slice %37 {offsets = [0, 16], sizes = [8, 8], strides = [1, 1]} : vector<8x64xf32> to vector<8x8xf32>
    %59 = arith.truncf %58 : vector<8x8xf32> to vector<8x8xbf16>
    %c0_30 = arith.constant 0 : index
    %c2 = arith.constant 2 : index
    %c0_31 = arith.constant 0 : index
    %c0_32 = arith.constant 0 : index
    %60 = vector.load %arg7[%c0_30, %c2, %c0_31, %c0_32] : memref<1x4x8x8xbf16, #tpu.memory_space<vmem>>, vector<1x1x8x8xbf16>
    %61 = vector.shape_cast %60 : vector<1x1x8x8xbf16> to vector<8x8xbf16>
    %62 = vector.shape_cast %59 : vector<8x8xbf16> to vector<1x1x8x8xbf16>
    tpu.vector_store %arg7[%c0_30, %c2, %c0_31, %c0_32], %62 {strides = array<i32>} : memref<1x4x8x8xbf16, #tpu.memory_space<vmem>>, vector<1x1x8x8xbf16>,
    %63 = vector.extract_strided_slice %37 {offsets = [0, 48], sizes = [8, 8], strides = [1, 1]} : vector<8x64xf32> to vector<8x8xf32>
    %64 = arith.truncf %63 : vector<8x8xf32> to vector<8x8xbf16>
    %c0_33 = arith.constant 0 : index
    %c2_34 = arith.constant 2 : index
    %c0_35 = arith.constant 0 : index
    %c0_36 = arith.constant 0 : index
    %65 = vector.load %arg8[%c0_33, %c2_34, %c0_35, %c0_36] : memref<1x4x8x8xbf16, #tpu.memory_space<vmem>>, vector<1x1x8x8xbf16>
    %66 = vector.shape_cast %65 : vector<1x1x8x8xbf16> to vector<8x8xbf16>
    %67 = vector.shape_cast %64 : vector<8x8xbf16> to vector<1x1x8x8xbf16>
    tpu.vector_store %arg8[%c0_33, %c2_34, %c0_35, %c0_36], %67 {strides = array<i32>} : memref<1x4x8x8xbf16, #tpu.memory_space<vmem>>, vector<1x1x8x8xbf16>,
    %68 = vector.extract_strided_slice %37 {offsets = [0, 24], sizes = [8, 8], strides = [1, 1]} : vector<8x64xf32> to vector<8x8xf32>
    %69 = arith.truncf %68 : vector<8x8xf32> to vector<8x8xbf16>
    %c0_37 = arith.constant 0 : index
    %c3 = arith.constant 3 : index
    %c0_38 = arith.constant 0 : index
    %c0_39 = arith.constant 0 : index
    %70 = vector.load %arg7[%c0_37, %c3, %c0_38, %c0_39] : memref<1x4x8x8xbf16, #tpu.memory_space<vmem>>, vector<1x1x8x8xbf16>
    %71 = vector.shape_cast %70 : vector<1x1x8x8xbf16> to vector<8x8xbf16>
    %72 = vector.shape_cast %69 : vector<8x8xbf16> to vector<1x1x8x8xbf16>
    tpu.vector_store %arg7[%c0_37, %c3, %c0_38, %c0_39], %72 {strides = array<i32>} : memref<1x4x8x8xbf16, #tpu.memory_space<vmem>>, vector<1x1x8x8xbf16>,
    %73 = vector.extract_strided_slice %37 {offsets = [0, 56], sizes = [8, 8], strides = [1, 1]} : vector<8x64xf32> to vector<8x8xf32>
    %74 = arith.truncf %73 : vector<8x8xf32> to vector<8x8xbf16>
    %c0_40 = arith.constant 0 : index
    %c3_41 = arith.constant 3 : index
    %c0_42 = arith.constant 0 : index
    %c0_43 = arith.constant 0 : index
    %75 = vector.load %arg8[%c0_40, %c3_41, %c0_42, %c0_43] : memref<1x4x8x8xbf16, #tpu.memory_space<vmem>>, vector<1x1x8x8xbf16>
    %76 = vector.shape_cast %75 : vector<1x1x8x8xbf16> to vector<8x8xbf16>
    %77 = vector.shape_cast %74 : vector<8x8xbf16> to vector<1x1x8x8xbf16>
    tpu.vector_store %arg8[%c0_40, %c3_41, %c0_42, %c0_43], %77 {strides = array<i32>} : memref<1x4x8x8xbf16, #tpu.memory_space<vmem>>, vector<1x1x8x8xbf16>,
    return
  }
  func.func @transform_0(%arg0: i32, %arg1: i32) -> (i32, i32, i32) {
    %c0_i32 = arith.constant 0 : i32
    %c0_i32_0 = arith.constant 0 : i32
    return %arg0, %arg1, %c0_i32 : i32, i32, i32
  }
  func.func @transform_1(%arg0: i32, %arg1: i32) -> (i32, i32) {
    %c0_i32 = arith.constant 0 : i32
    %c0_i32_0 = arith.constant 0 : i32
    %c0_i32_1 = arith.constant 0 : i32
    return %c0_i32, %c0_i32_0 : i32, i32
  }
  func.func @transform_2(%arg0: i32, %arg1: i32) -> (i32, i32) {
    %c0_i32 = arith.constant 0 : i32
    %c0_i32_0 = arith.constant 0 : i32
    %c0_i32_1 = arith.constant 0 : i32
    return %c0_i32, %c0_i32_0 : i32, i32
  }
  func.func @transform_3(%arg0: i32, %arg1: i32) -> (i32, i32) {
    %c0_i32 = arith.constant 0 : i32
    %c0_i32_0 = arith.constant 0 : i32
    %c0_i32_1 = arith.constant 0 : i32
    return %c0_i32, %c0_i32_0 : i32, i32
  }
  func.func @transform_4(%arg0: i32, %arg1: i32) -> (i32, i32) {
    %c0_i32 = arith.constant 0 : i32
    %c0_i32_0 = arith.constant 0 : i32
    %c0_i32_1 = arith.constant 0 : i32
    return %c0_i32, %c0_i32_0 : i32, i32
  }
  func.func @transform_5(%arg0: i32, %arg1: i32) -> (i32, i32, i32, i32) {
    %c0_i32 = arith.constant 0 : i32
    %c0_i32_0 = arith.constant 0 : i32
    %c0_i32_1 = arith.constant 0 : i32
    return %arg0, %c0_i32, %arg1, %c0_i32_0 : i32, i32, i32, i32
  }
  func.func @transform_6(%arg0: i32, %arg1: i32) -> (i32, i32, i32, i32) {
    %c0_i32 = arith.constant 0 : i32
    %c0_i32_0 = arith.constant 0 : i32
    %c0_i32_1 = arith.constant 0 : i32
    return %arg0, %c0_i32, %arg1, %c0_i32_0 : i32, i32, i32, i32
  }
}

</mosaic_0001>

<llo_original>
// kernel: tpu_custom_call.1
$region0: #{tpu_custom_call.1}
  #allocation0 [shape = 'u32[]', space=smem, size = 0x4, offset = 0x4, fixed_abs, tag = 'smem constant byte address 0x4 - core index']
  #allocation1 [shape = 'u32[72,128]{1,0:T(1,128)}', space=vmem, size = 0x9000, scoped, tag = 'internal scratch']
  %s0 = inlined_call_operand.hbm [shape: f32[2,8,32], index: 0, kind: input, shape index: {}]
  %s1 = inlined_call_operand.hbm [shape: f32[1,32], index: 1, kind: input, shape index: {}]
  %s2 = inlined_call_operand.vmem [shape: f32[1,32], index: 2, kind: input, shape index: {}]
  %s3 = inlined_call_operand.hbm [shape: bf16[32,64], index: 3, kind: input, shape index: {}]
  %s4 = inlined_call_operand.vmem [shape: f32[1,64], index: 4, kind: input, shape index: {}]
  %s5 = inlined_call_operand.hbm [shape: bf16[2,4,8,8], index: 5, kind: output, shape index: {0}]
  %s6 = inlined_call_operand.hbm [shape: bf16[2,4,8,8], index: 6, kind: output, shape index: {1}]
  %7 = xla_tuple %s5, %s6
  %s8 = sld [smem:[#allocation0]]
  $region73: #{tpu_custom_call.1} parent=0
    _
  %s10 = ssub.s32 1, %s8
  %s11 = scalar_select 0, %s10, %s8
  $region1: #{tpu_custom_call.1} parent=0
    #allocation2 [shape = 'u8[8192]{0}', space=vmem, size = 0x2000, scoped, tag = 'input window, operand 0']
    #allocation3 [shape = 's32[2]{0}', space=sflag, size = 0x8, scoped, tag = 'scoped memory for tpu_custom_call.1']
    #allocation4 [shape = 's32[2]{0}', space=sflag, size = 0x8, scoped, tag = 'scoped memory for tpu_custom_call.1']
    #allocation5 [shape = 'u8[512]{0}', space=vmem, size = 0x400, scoped, tag = 'input window, operand 1, single buffered']
    #allocation6 [shape = 's32[1]{0}', space=sflag, size = 0x4, scoped, tag = 'scoped memory for tpu_custom_call.1']
    #allocation7 [shape = 'u8[8192]{0}', space=vmem, size = 0x2000, scoped, tag = 'input window, operand 3, single buffered']
    #allocation8 [shape = 'u8[16384]{0}', space=vmem, size = 0x4000, scoped, tag = 'output window, operand 0']
    #allocation9 [shape = 'u8[16384]{0}', space=vmem, size = 0x4000, scoped, tag = 'output window, operand 1']
    #allocation10 [shape = 's32[2]{0}', space=sflag, size = 0x8, scoped, tag = 'scoped memory for tpu_custom_call.1']
    %12 = vsyncpa [#allocation3], 0
    %s13 = scalar_lea.sflag [#allocation3], 1
    %14 = vsyncpa %s13, 0
    %15 = vsyncpa [#allocation6], 0
    %16 = vsyncpa [#allocation4], 0
    %s17 = scalar_lea.sflag [#allocation4], 1
    %18 = vsyncpa %s17, 0
    %19 = vsyncpa [#allocation10], 0
    %s20 = scalar_lea.sflag [#allocation10], 1
    %21 = vsyncpa %s20, 0
    loop: start=0, step=1, limit=4
    $region2: #{tpu_custom_call.1} parent=1 // loop_pre_header
      _
    $region3: #{tpu_custom_call.1} parent=1 // loop_header
      %s23 = sphi 0, %s27
      %p24 = scmp.ge.s32.totalorder %s23, 4
      %s30 = sphi 0, %s42
      %s31 = sphi 0, %s38
      %s32 = sphi 0, %s30
      %s33 = sphi 0, %s31
      %s34 = sphi 0, %s32
      %s35 = sphi 0, %s33
      %s47 = sphi 0, %s49
      %s50 = sphi 0, %s47
      %s51 = sphi 0, %s50
      %s67 = sphi 0, %s51
      %s71 = sphi 0, %s71
      %s73 = sphi 0, %s71
      %s74 = sphi 0, %s73
      %s88 = sphi 0, %s74
      %s92 = sphi 0, %s92
      %s94 = sphi 0, %s92
      %s95 = sphi 0, %s94
      %s109 = sphi 0, %s95
      %s113 = sphi 0, %s113
      %s115 = sphi 0, %s113
      %s116 = sphi 0, %s115
      %s130 = sphi 0, %s116
      %s134 = sphi 0, %s134
      %s136 = sphi 0, %s134
      %s137 = sphi 0, %s136
      %s151 = sphi 0, %s137
      %s159 = sphi 0, %s161
      %s162 = sphi 0, %s159
      %s163 = sphi 0, %s162
      %s179 = sphi 0, %s163
      %s187 = sphi 0, %s189
      %s190 = sphi 0, %s187
      %s191 = sphi 0, %s190
      %s207 = sphi 0, %s191
    $region4: #{tpu_custom_call.1} parent=1 // loop_header_branch
      %26 = sbr.rel (%p24) target = $region8
    $region5: #{tpu_custom_call.1} parent=1 // loop_body
      %s28 = ssub.s32 %s23, 1
      %s29 = ssub.s32 %s23, 2
      %s36 = sadd.s32 1, %s31
      %p37 = scmp.ge.s32.totalorder %s36, 1
      %s38 = scalar_select %p37, 0, %s36
      %s39 = sadd.s32 1, %s30
      %s40 = scalar_select %p37, %s39, %s30
      %p41 = scmp.ge.s32.totalorder %s40, 2
      %s42 = scalar_select %p41, 0, %s40
      %s43 = ssub.s32 %s30, %s42
      %s44 = ssub.s32 %s31, %s38
      %s45 = sor.u32 %s43, %s44
      %p46 = scmp.eq.s32.totalorder %s45, 0
      %s48 = sadd.s32 %s47, 1
      %s49 = scalar_select %p46, %s47, %s48
      %p52 = pneg %p46
      %p53 = scmp.eq.s32.totalorder %s23, 1
      %p54 = por %p52, %p53
      %p55 = scmp.ne.s32.totalorder %s47, %s50
      %p56 = scmp.eq.s32.totalorder %s23, 0
      %p57 = por %p55, %p56
      %p58 = scmp.ne.s32.totalorder %s47, %s50
      %p59 = scmp.eq.s32.totalorder %s28, 1
      %p60 = por %p58, %p59
      %p61 = scmp.ne.s32.totalorder %s50, %s51
      %p62 = scmp.eq.s32.totalorder %s28, 0
      %p63 = por %p61, %p62
      %p64 = scmp.ne.s32.totalorder %s50, %s51
      %p65 = scmp.eq.s32.totalorder %s29, 1
      %p66 = por %p64, %p65
      %p68 = scmp.ne.s32.totalorder %s51, %s67
      %p69 = scmp.eq.s32.totalorder %s29, 0
      %p70 = por %p68, %p69
      %s72 = sadd.s32 %s71, 1
      %p75 = scmp.eq.s32.totalorder %s23, 1
      %p76 = scmp.ne.s32.totalorder %s71, %s73
      %p77 = scmp.eq.s32.totalorder %s23, 0
      %p78 = por %p76, %p77
      %p79 = scmp.ne.s32.totalorder %s71, %s73
      %p80 = scmp.eq.s32.totalorder %s28, 1
      %p81 = por %p79, %p80
      %p82 = scmp.ne.s32.totalorder %s73, %s74
      %p83 = scmp.eq.s32.totalorder %s28, 0
      %p84 = por %p82, %p83
      %p85 = scmp.ne.s32.totalorder %s73, %s74
      %p86 = scmp.eq.s32.totalorder %s29, 1
      %p87 = por %p85, %p86
      %p89 = scmp.ne.s32.totalorder %s74, %s88
      %p90 = scmp.eq.s32.totalorder %s29, 0
      %p91 = por %p89, %p90
      %s93 = sadd.s32 %s92, 1
      %p96 = scmp.eq.s32.totalorder %s23, 1
      %p97 = scmp.ne.s32.totalorder %s92, %s94
      %p98 = scmp.eq.s32.totalorder %s23, 0
      %p99 = por %p97, %p98
      %p100 = scmp.ne.s32.totalorder %s92, %s94
      %p101 = scmp.eq.s32.totalorder %s28, 1
      %p102 = por %p100, %p101
      %p103 = scmp.ne.s32.totalorder %s94, %s95
      %p104 = scmp.eq.s32.totalorder %s28, 0
      %p105 = por %p103, %p104
      %p106 = scmp.ne.s32.totalorder %s94, %s95
      %p107 = scmp.eq.s32.totalorder %s29, 1
      %p108 = por %p106, %p107
      %p110 = scmp.ne.s32.totalorder %s95, %s109
      %p111 = scmp.eq.s32.totalorder %s29, 0
      %p112 = por %p110, %p111
      %s114 = sadd.s32 %s113, 1
      %p117 = scmp.eq.s32.totalorder %s23, 1
      %p118 = scmp.ne.s32.totalorder %s113, %s115
      %p119 = scmp.eq.s32.totalorder %s23, 0
      %p120 = por %p118, %p119
      %p121 = scmp.ne.s32.totalorder %s113, %s115
      %p122 = scmp.eq.s32.totalorder %s28, 1
      %p123 = por %p121, %p122
      %p124 = scmp.ne.s32.totalorder %s115, %s116
      %p125 = scmp.eq.s32.totalorder %s28, 0
      %p126 = por %p124, %p125
      %p127 = scmp.ne.s32.totalorder %s115, %s116
      %p128 = scmp.eq.s32.totalorder %s29, 1
      %p129 = por %p127, %p128
      %p131 = scmp.ne.s32.totalorder %s116, %s130
      %p132 = scmp.eq.s32.totalorder %s29, 0
      %p133 = por %p131, %p132
      %s135 = sadd.s32 %s134, 1
      %p138 = scmp.eq.s32.totalorder %s23, 1
      %p139 = scmp.ne.s32.totalorder %s134, %s136
      %p140 = scmp.eq.s32.totalorder %s23, 0
      %p141 = por %p139, %p140
      %p142 = scmp.ne.s32.totalorder %s134, %s136
      %p143 = scmp.eq.s32.totalorder %s28, 1
      %p144 = por %p142, %p143
      %p145 = scmp.ne.s32.totalorder %s136, %s137
      %p146 = scmp.eq.s32.totalorder %s28, 0
      %p147 = por %p145, %p146
      %p148 = scmp.ne.s32.totalorder %s136, %s137
      %p149 = scmp.eq.s32.totalorder %s29, 1
      %p150 = por %p148, %p149
      %p152 = scmp.ne.s32.totalorder %s137, %s151
      %p153 = scmp.eq.s32.totalorder %s29, 0
      %p154 = por %p152, %p153
      %s155 = ssub.s32 %s30, %s42
      %s156 = ssub.s32 %s31, %s38
      %s157 = sor.u32 %s155, %s156
      %p158 = scmp.eq.s32.totalorder %s157, 0
      %s160 = sadd.s32 %s159, 1
      %s161 = scalar_select %p158, %s159, %s160
      %p164 = pneg %p158
      %p165 = scmp.eq.s32.totalorder %s23, 1
      %p166 = por %p164, %p165
      %p167 = scmp.ne.s32.totalorder %s159, %s162
      %p168 = scmp.eq.s32.totalorder %s23, 0
      %p169 = por %p167, %p168
      %p170 = scmp.ne.s32.totalorder %s159, %s162
      %p171 = scmp.eq.s32.totalorder %s28, 1
      %p172 = por %p170, %p171
      %p173 = scmp.ne.s32.totalorder %s162, %s163
      %p174 = scmp.eq.s32.totalorder %s28, 0
      %p175 = por %p173, %p174
      %p176 = scmp.ne.s32.totalorder %s162, %s163
      %p177 = scmp.eq.s32.totalorder %s29, 1
      %p178 = por %p176, %p177
      %p180 = scmp.ne.s32.totalorder %s163, %s179
      %p181 = scmp.eq.s32.totalorder %s29, 0
      %p182 = por %p180, %p181
      %s183 = ssub.s32 %s30, %s42
      %s184 = ssub.s32 %s31, %s38
      %s185 = sor.u32 %s183, %s184
      %p186 = scmp.eq.s32.totalorder %s185, 0
      %s188 = sadd.s32 %s187, 1
      %s189 = scalar_select %p186, %s187, %s188
      %p192 = pneg %p186
      %p193 = scmp.eq.s32.totalorder %s23, 1
      %p194 = por %p192, %p193
      %p195 = scmp.ne.s32.totalorder %s187, %s190
      %p196 = scmp.eq.s32.totalorder %s23, 0
      %p197 = por %p195, %p196
      %p198 = scmp.ne.s32.totalorder %s187, %s190
      %p199 = scmp.eq.s32.totalorder %s28, 1
      %p200 = por %p198, %p199
      %p201 = scmp.ne.s32.totalorder %s190, %s191
      %p202 = scmp.eq.s32.totalorder %s28, 0
      %p203 = por %p201, %p202
      %p204 = scmp.ne.s32.totalorder %s190, %s191
      %p205 = scmp.eq.s32.totalorder %s29, 1
      %p206 = por %p204, %p205
      %p208 = scmp.ne.s32.totalorder %s191, %s207
      %p209 = scmp.eq.s32.totalorder %s29, 0
      %p210 = por %p208, %p209
      %p211 = scmp.le.s32.totalorder 1, %s23
      %p212 = scmp.lt.s32.totalorder %s23, 3
      %p213 = pnand %p211, %p212
      %p214 = pneg %p213
      // Predicated region
      $region9: #{tpu_custom_call.1} parent=5 // pred_check
        _
      $region10: #{tpu_custom_call.1} parent=5 // pred_check_branch
        %216 = sbr.rel (%p213) target = $region12
      $region11: #{tpu_custom_call.1} parent=5 // pred_region
        %s217 = ssub.s32 %s23, 1
        // Predicated region
        $region13: #{tpu_custom_call.1} parent=11 // pred_check
          %p218 = pneg %p84
        $region14: #{tpu_custom_call.1} parent=11 // pred_check_branch
          %220 = sbr.rel (%p218) target = $region16
        $region15: #{tpu_custom_call.1} parent=11 // pred_region
          %222 = vsyncadd [#allocation6], 0
          %s224 = sshll.u32 %s1, 4
          %s225 = int_to_ptr.hbm [resolvable:$true] %s224
          %s226 = sshll.u32 [#allocation5], 4
          %s227 = int_to_ptr.vmem [resolvable:$true] %s226
          %229 = dma.hbm_to_vmem [thread:$0]  %s225, 16, %s227, [#allocation6]
        $region16: #{tpu_custom_call.1} parent=11 // pred_fallthru
          _
        // Predicated region
        $region17: #{tpu_custom_call.1} parent=11 // pred_check
          %p230 = pneg %p105
        $region18: #{tpu_custom_call.1} parent=11 // pred_check_branch
          %232 = sbr.rel (%p230) target = $region20
        $region19: #{tpu_custom_call.1} parent=11 // pred_region
          _
        $region20: #{tpu_custom_call.1} parent=11 // pred_fallthru
          _
        // Predicated region
        $region21: #{tpu_custom_call.1} parent=11 // pred_check
          %p233 = pneg %p126
        $region22: #{tpu_custom_call.1} parent=11 // pred_check_branch
          %235 = sbr.rel (%p233) target = $region24
        $region23: #{tpu_custom_call.1} parent=11 // pred_region
          %237 = vsyncadd [#allocation6], 0
          %s238 = sshll.u32 %s3, 4
          %s239 = int_to_ptr.hbm [resolvable:$true] %s238
          %s240 = sshll.u32 [#allocation7], 4
          %s241 = int_to_ptr.vmem [resolvable:$true] %s240
          %246 = dma.hbm_to_vmem [thread:$0]  %s239, 256, %s241, [#allocation6], 64, 64, 4
        $region24: #{tpu_custom_call.1} parent=11 // pred_fallthru
          _
        // Predicated region
        $region25: #{tpu_custom_call.1} parent=11 // pred_check
          %p247 = pneg %p147
        $region26: #{tpu_custom_call.1} parent=11 // pred_check_branch
          %249 = sbr.rel (%p247) target = $region28
        $region27: #{tpu_custom_call.1} parent=11 // pred_region
          _
        $region28: #{tpu_custom_call.1} parent=11 // pred_fallthru
          _
      $region12: #{tpu_custom_call.1} parent=5 // pred_fallthru
        _
      %p250 = scmp.lt.s32.totalorder %s23, 2
      // Predicated region
      $region29: #{tpu_custom_call.1} parent=5 // pred_check
        %p251 = pneg %p250
      $region30: #{tpu_custom_call.1} parent=5 // pred_check_branch
        %253 = sbr.rel (%p251) target = $region32
      $region31: #{tpu_custom_call.1} parent=5 // pred_region
        // Predicated region
        $region33: #{tpu_custom_call.1} parent=31 // pred_check
          %p254 = pneg %p57
        $region34: #{tpu_custom_call.1} parent=31 // pred_check_branch
          %256 = sbr.rel (%p254) target = $region36
        $region35: #{tpu_custom_call.1} parent=31 // pred_region
          %s257 = sand.u32 %s47, 1
          %s258 = scalar_lea.sflag [#allocation3], %s257
          %s259 = sand.u32 %s47, 1
          %s260 = smul.addr %s259, 8
          %s261 = scalar_lea.vmem [#allocation2], %s260
          %263 = vsyncadd %s258, 0
          %s264 = sadd.s32 %s31, %s30
          %s265 = smul.addr %s264, 8
          %s266 = scalar_lea.hbm %s0, %s265
          %s268 = sshll.u32 %s266, 4
          %s269 = int_to_ptr.hbm [resolvable:$true] %s268
          %s270 = sshll.u32 %s261, 4
          %s271 = int_to_ptr.vmem [resolvable:$true] %s270
          %273 = dma.hbm_to_vmem [thread:$0]  %s269, 128, %s271, %s258
        $region36: #{tpu_custom_call.1} parent=31 // pred_fallthru
          _
      $region32: #{tpu_custom_call.1} parent=5 // pred_fallthru
        _
      %p274 = scmp.le.s32.totalorder 1, %s23
      %p275 = scmp.lt.s32.totalorder %s23, 3
      %p276 = pnand %p274, %p275
      %p277 = pneg %p276
      // Predicated region
      $region37: #{tpu_custom_call.1} parent=5 // pred_check
        _
      $region38: #{tpu_custom_call.1} parent=5 // pred_check_branch
        %279 = sbr.rel (%p276) target = $region40
      $region39: #{tpu_custom_call.1} parent=5 // pred_region
        %s280 = ssub.s32 %s23, 1
        %s281 = sand.u32 %s50, 1
        %s282 = scalar_lea.sflag [#allocation3], %s281
        %s283 = sand.u32 %s50, 1
        %s284 = smul.addr %s283, 8
        %s285 = scalar_lea.vmem [#allocation2], %s284
        // Predicated region
        $region41: #{tpu_custom_call.1} parent=39 // pred_check
          %p286 = pneg %p63
        $region42: #{tpu_custom_call.1} parent=39 // pred_check_branch
          %288 = sbr.rel (%p286) target = $region44
        $region43: #{tpu_custom_call.1} parent=39 // pred_region
          %290 = dma.done %s282, 128
        $region44: #{tpu_custom_call.1} parent=39 // pred_fallthru
          _
        // Predicated region
        $region45: #{tpu_custom_call.1} parent=39 // pred_check
          %p291 = pneg %p84
        $region46: #{tpu_custom_call.1} parent=39 // pred_check_branch
          %293 = sbr.rel (%p291) target = $region48
        $region47: #{tpu_custom_call.1} parent=39 // pred_region
          %295 = dma.done [#allocation6], 16
        $region48: #{tpu_custom_call.1} parent=39 // pred_fallthru
          _
        // Predicated region
        $region49: #{tpu_custom_call.1} parent=39 // pred_check
          %p296 = pneg %p126
        $region50: #{tpu_custom_call.1} parent=39 // pred_check_branch
          %298 = sbr.rel (%p296) target = $region52
        $region51: #{tpu_custom_call.1} parent=39 // pred_region
          %300 = dma.done [#allocation6], 256
        $region52: #{tpu_custom_call.1} parent=39 // pred_fallthru
          _
        %s301 = sand.u32 %s50, 1
        %s302 = scalar_lea.sflag [#allocation3], %s301
        %s303 = sand.u32 %s50, 1
        %s304 = smul.addr %s303, 8
        %s305 = scalar_lea.vmem [#allocation2], %s304
        %p306 = pneg %p63
        %p307 = pneg %p60
        %p308 = pneg %p84
        %p309 = pneg %p81
        %p310 = pneg %p105
        %p311 = pneg %p102
        %p312 = pneg %p126
        %p313 = pneg %p123
        %p314 = pneg %p147
        %p315 = pneg %p144
        %p316 = pneg %p175
        %p317 = pneg %p172
        %s318 = sand.u32 %s162, 1
        %s319 = scalar_lea.sflag [#allocation4], %s318
        %s320 = sand.u32 %s162, 1
        %s321 = smul.addr %s320, 16
        %s322 = scalar_lea.vmem [#allocation8], %s321
        %p323 = pneg %p203
        %p324 = pneg %p200
        %s325 = sand.u32 %s190, 1
        %s326 = scalar_lea.sflag [#allocation10], %s325
        %s327 = sand.u32 %s190, 1
        %s328 = smul.addr %s327, 16
        %s329 = scalar_lea.vmem [#allocation9], %s328
        %v331 = vld [vmem:[%s285] sm:$0xff]
        %v332 = vld [vmem:[#allocation5] sm:$0x1]
        %v333 = vld [vmem:[%s2] sm:$0x1]
        %vm334 = vcmask 261120
        %v335 = vsel %vm334, %v331, 0.0
        %336 = vadd.xlane.f32.xlu0 %v335
        %v337 = vpop.xlane.xlu0 %336
        %v338 = vrcp.pop 32.0
        %v339 = vmul.f32 32.0, %v338
        %v340 = vsub.f32 1.0, %v339
        %v341 = vmul.f32 %v338, %v340
        %v342 = vadd.f32 %v338, %v341
        %vm343 = vweird.f32 %v338
        %v344 = vsel %vm343, %v338, %v342
        %v345 = vmul.f32 %v337, %v344
        %v346 = vsub.f32 %v331, %v345
        %v347 = vmul.f32 %v346, %v346
        %v348 = vsel %vm334, %v347, 0.0
        %349 = vadd.xlane.f32.xlu0 %v348
        %v350 = vpop.xlane.xlu0 %349
        %v351 = vmul.f32 %v350, %v344
        %v352 = vadd.f32 %v351, 1e-05
        %v353 = vrsqrt.pop %v352
        %v354 = vmul.f32 %v353, %v352
        %v355 = vmul.f32 %v354, %v353
        %v356 = vmul.f32 0.5, %v355
        %v357 = vsub.f32 1.5, %v356
        %v358 = vmul.f32 %v353, %v357
        %vm359 = vweird.f32 %v352
        %vm360 = vweird.f32 %v353
        %vm361 = vmor %vm359, %vm360
        %v362 = vsel %vm361, %v353, %v358
        %v363 = vmul.f32 %v346, %v362
        %v365 = vperm.slane %v332, 0
        %v367 = vmul.f32 %v363, %v365
        %v369 = vperm.slane %v333, 0
        %v371 = vadd.f32 %v367, %v369
        %v372 = vpack.c.bf16 %v371, %v371
        %v373 = vld [vmem:[#allocation7] sm:$0xf]
        %v374 = vld [vmem:[#allocation7 + $0x4] sm:$0xf]
        %v375 = vld [vmem:[#allocation7 + $0x8] sm:$0xf]
        %v376 = vld [vmem:[#allocation7 + $0xc] sm:$0xf]
        %v377 = vld [vmem:[%s4] sm:$0x1]
        %v379 = vperm.slane %v377, 0
        %v385 = vunpack.c.l.b16 %v373
        %v386 = vunpack.c.l.b16 %v374
        %v387 = vunpack.c.l.b16 %v375
        %v388 = vunpack.c.l.b16 %v376
        %v389 = vpack.c.b16 %v386, %v385
        %v390 = vpack.c.b16 %v388, %v387
        %v394 = vsel %vm334, %v372, 0
        %396 = vmatpush.bf16.msra.mxu0 0
        %397 = vmatpush.bf16.msra.mxu0 0
        %398 = vmatpush.bf16.msra.mxu0 0
        %399 = vmatpush.bf16.msra.mxu0 0
        %400 = vmatpush.bf16.msra.mxu0 0
        %401 = vmatpush.bf16.msra.mxu0 0
        %402 = vmatpush.bf16.msra.mxu0 %v390
        %403 = vmatpush.bf16.msra.mxu0 %v389
        %404 = vmatmul.bf16.gmra.mxu0 %v394
        %v405 = vpop.f32.mrf.mxu0
        %v406 = vadd.f32 %v379, %v405
        %v407 = vpop.f32.mrf.mxu0
        %408 = vdwg.mxu0
        %v409 = vpack.c.bf16 %v406, %v406
        %vm410 = vcmask 60416
        %411 = vst.msk [vmem:[%s322] sm:$0xf] %vm410, %v409
        %413 = vrot.lane.b32.xlu0 %v409, 96
        %v414 = vpop.permute.xlu0 %413
        %416 = vst.msk [vmem:[%s329] sm:$0xf] %vm410, %v414
        %417 = vrot.lane.b32.xlu0 %v409, 120
        %v418 = vpop.permute.xlu0 %417
        %s420 = scalar_lea.vmem %s322, 4 [#allocation8]
        %421 = vst.msk [vmem:[%s420] sm:$0xf] %vm410, %v418
        %422 = vrot.lane.b32.xlu0 %v409, 88
        %v423 = vpop.permute.xlu0 %422
        %s425 = scalar_lea.vmem %s329, 4 [#allocation9]
        %426 = vst.msk [vmem:[%s425] sm:$0xf] %vm410, %v423
        %427 = vrot.lane.b32.xlu0 %v409, 112
        %v428 = vpop.permute.xlu0 %427
        %s430 = scalar_lea.vmem %s322, 8 [#allocation8]
        %431 = vst.msk [vmem:[%s430] sm:$0xf] %vm410, %v428
        %432 = vrot.lane.b32.xlu0 %v409, 80
        %v433 = vpop.permute.xlu0 %432
        %s435 = scalar_lea.vmem %s329, 8 [#allocation9]
        %436 = vst.msk [vmem:[%s435] sm:$0xf] %vm410, %v433
        %437 = vrot.lane.b32.xlu0 %v409, 104
        %v438 = vpop.permute.xlu0 %437
        %s440 = scalar_lea.vmem %s322, 12 [#allocation8]
        %441 = vst.msk [vmem:[%s440] sm:$0xf] %vm410, %v438
        %442 = vrot.lane.b32.xlu0 %v409, 72
        %v443 = vpop.permute.xlu0 %442
        %s445 = scalar_lea.vmem %s329, 12 [#allocation9]
        %446 = vst.msk [vmem:[%s445] sm:$0xf] %vm410, %v443
        %s447 = sand.u32 %s162, 1
        %s448 = scalar_lea.sflag [#allocation4], %s447
        %s449 = sand.u32 %s162, 1
        %s450 = smul.addr %s449, 16
        %s451 = scalar_lea.vmem [#allocation8], %s450
        %s452 = sand.u32 %s190, 1
        %s453 = scalar_lea.sflag [#allocation10], %s452
        %s454 = sand.u32 %s190, 1
        %s455 = smul.addr %s454, 16
        %s456 = scalar_lea.vmem [#allocation9], %s455
        // Predicated region
        $region53: #{tpu_custom_call.1} parent=39 // pred_check
          %p457 = pneg %p172
        $region54: #{tpu_custom_call.1} parent=39 // pred_check_branch
          %459 = sbr.rel (%p457) target = $region56
        $region55: #{tpu_custom_call.1} parent=39 // pred_region
          %461 = vsyncadd %s448, 0
          %s462 = smul.addr %s32, 4
          %s463 = sadd.s32 %s33, %s462
          %s464 = smul.addr %s463, 4
          %s465 = scalar_lea.hbm %s5, %s464
          %s466 = sshll.u32 %s451, 4
          %s467 = int_to_ptr.vmem [resolvable:$true] %s466
          %s468 = sshll.u32 %s465, 4
          %s469 = int_to_ptr.hbm [resolvable:$true] %s468
          %474 = dma.vmem_to_hbm [thread:$0]  %s467, 256, %s469, %s448, 64, 64, 4
        $region56: #{tpu_custom_call.1} parent=39 // pred_fallthru
          _
        // Predicated region
        $region57: #{tpu_custom_call.1} parent=39 // pred_check
          %p475 = pneg %p200
        $region58: #{tpu_custom_call.1} parent=39 // pred_check_branch
          %477 = sbr.rel (%p475) target = $region60
        $region59: #{tpu_custom_call.1} parent=39 // pred_region
          %479 = vsyncadd %s453, 0
          %s480 = smul.addr %s32, 4
          %s481 = sadd.s32 %s33, %s480
          %s482 = smul.addr %s481, 4
          %s483 = scalar_lea.hbm %s6, %s482
          %s484 = sshll.u32 %s456, 4
          %s485 = int_to_ptr.vmem [resolvable:$true] %s484
          %s486 = sshll.u32 %s483, 4
          %s487 = int_to_ptr.hbm [resolvable:$true] %s486
          %492 = dma.vmem_to_hbm [thread:$0]  %s485, 256, %s487, %s453, 64, 64, 4
        $region60: #{tpu_custom_call.1} parent=39 // pred_fallthru
          _
      $region40: #{tpu_custom_call.1} parent=5 // pred_fallthru
        _
      %p493 = scmp.le.s32.totalorder 2, %s23
      // Predicated region
      $region61: #{tpu_custom_call.1} parent=5 // pred_check
        %p494 = pneg %p493
      $region62: #{tpu_custom_call.1} parent=5 // pred_check_branch
        %496 = sbr.rel (%p494) target = $region64
      $region63: #{tpu_custom_call.1} parent=5 // pred_region
        %s497 = ssub.s32 %s23, 2
        // Predicated region
        $region65: #{tpu_custom_call.1} parent=63 // pred_check
          %p498 = pneg %p178
        $region66: #{tpu_custom_call.1} parent=63 // pred_check_branch
          %500 = sbr.rel (%p498) target = $region68
        $region67: #{tpu_custom_call.1} parent=63 // pred_region
          %s501 = sand.u32 %s163, 1
          %s502 = scalar_lea.sflag [#allocation4], %s501
          %s503 = sand.u32 %s163, 1
          %s504 = smul.addr %s503, 16
          %s505 = scalar_lea.vmem [#allocation8], %s504
          %507 = dma.done %s502, 256
        $region68: #{tpu_custom_call.1} parent=63 // pred_fallthru
          _
        // Predicated region
        $region69: #{tpu_custom_call.1} parent=63 // pred_check
          %p508 = pneg %p206
        $region70: #{tpu_custom_call.1} parent=63 // pred_check_branch
          %510 = sbr.rel (%p508) target = $region72
        $region71: #{tpu_custom_call.1} parent=63 // pred_region
          %s511 = sand.u32 %s191, 1
          %s512 = scalar_lea.sflag [#allocation10], %s511
          %s513 = sand.u32 %s191, 1
          %s514 = smul.addr %s513, 16
          %s515 = scalar_lea.vmem [#allocation9], %s514
          %517 = dma.done %s512, 256
        $region72: #{tpu_custom_call.1} parent=63 // pred_fallthru
          _
      $region64: #{tpu_custom_call.1} parent=5 // pred_fallthru
        _
    $region6: #{tpu_custom_call.1} parent=1 // loop_footer
      %s27 = sadd.s32 1, %s23
    $region7: #{tpu_custom_call.1} parent=1 // loop_footer_branch
      %22 = sbr.rel target = $region3
    $region8: #{tpu_custom_call.1} parent=1 // loop_exit
      _
    %518 = vsyncpa [#allocation3], 1
    %s519 = scalar_lea.sflag [#allocation3], 1
    %520 = vsyncpa %s519, 1
    %521 = vsyncpa [#allocation6], 1
    %522 = vsyncpa [#allocation4], 1
    %s523 = scalar_lea.sflag [#allocation4], 1
    %524 = vsyncpa %s523, 1
    %525 = vsyncpa [#allocation10], 1
    %s526 = scalar_lea.sflag [#allocation10], 1
    %527 = vsyncpa %s526, 1

</llo_original>
